<compile_context>
chip_gen: v7x
topology: tpu7x:2x2x1
jax: 0.10.0
libtpu: 0.0.40
codegen_flags: <defaults>
</compile_context>

<pallas_src>
import jax
import jax.numpy as jnp
from jax.experimental import pallas as pl
from jax.experimental.pallas import tpu as pltpu

KH = KW = 7
PAD = 3


def _make_kernel(W, HW, KBpad):
    def kernel(x_ref, w_ref, b_ref, o_ref, r_ref):
        # x_ref: (1, KBpad, Lpad) bf16  column-im2col slab, rows=(kw,cin), lanes=(hp,w)
        # w_ref: (Cout, KH*KBpad) bf16
        # b_ref: (Cout, 1) f32
        # o_ref: (1, Cout, HW) f32
        # r_ref: (KH*KBpad, HW) bf16   VMEM scratch: full im2col matrix
        #
        # Build the im2col matrix with KH sublane-aligned, constant-lane-offset
        # block copies (no strided relayouts, nothing live carried across taps).
        for kh in range(KH):
            r_ref[kh * KBpad:(kh + 1) * KBpad, :] = x_ref[0, :, kh * W: kh * W + HW]

        # Single deep contraction on the MXU (bf16 operands, f32 accumulate).
        y = jnp.dot(w_ref[...], r_ref[...],
                    preferred_element_type=jnp.float32)        # (Cout, HW)

        # Bias + tanh (EUP slot), lane-dense store.
        o_ref[0, :, :] = jnp.tanh(y + b_ref[...]).astype(o_ref.dtype)

    return kernel


def final_padding_block_forward(x_nchw, weight_oihw, bias):
    """x_nchw: (N, Cin, H, W); weight_oihw: (Cout, Cin, 7, 7); bias: (Cout,)."""
    N, Cin, H, W = x_nchw.shape
    Cout = weight_oihw.shape[0]
    Hp, Wp = H + 2 * PAD, W + 2 * PAD
    HW = H * W
    KB = KW * Cin                           # rows per kh-block (28)
    KBpad = ((KB + 7) // 8) * 8             # sublane-aligned kh-block (32)
    K = KH * KBpad                          # padded contraction depth (224)
    Lreal = Hp * W                          # 352; max in-kernel lane idx + 1
    Lpad = ((Lreal + 127) // 128) * 128     # 384, lane-tile aligned

    # ---- XLA-side layout prep (pure data movement, no conv math) -----------
    # Reflection pad, then duplicate the W axis KW times ("column im2col") so
    # every (kh, kw) tap becomes a constant lane offset with a dense output
    # index -- this removes the padded-stride compaction step entirely.
    x_pad = jnp.pad(x_nchw.astype(jnp.float32),
                    ((0, 0), (0, 0), (PAD, PAD), (PAD, PAD)), mode="reflect")
    cols = jnp.stack([x_pad[:, :, :, kw:kw + W] for kw in range(KW)], axis=1)
    xcols = cols.reshape(N, KB, Lreal)                  # rows=(kw,c), lanes=(hp,w)
    xcols = jnp.pad(xcols, ((0, 0), (0, KBpad - KB), (0, Lpad - Lreal)))
    xcols = xcols.astype(jnp.bfloat16)

    # Weights: (Cout, Cin, KH, KW) -> (Cout, kh, (kw, cin)) padded to KBpad.
    w_r = jnp.transpose(weight_oihw, (0, 2, 3, 1)).reshape(Cout, KH, KB)
    w_r = jnp.pad(w_r, ((0, 0), (0, 0), (0, KBpad - KB)))
    w_mat = w_r.reshape(Cout, K).astype(jnp.bfloat16)
    b2 = bias.reshape(Cout, 1).astype(jnp.float32)

    kernel = _make_kernel(W, HW, KBpad)

    out_flat = pl.pallas_call(
        kernel,
        out_shape=jax.ShapeDtypeStruct((N, Cout, HW), jnp.float32),
        grid=(N,),
        in_specs=[
            pl.BlockSpec((1, KBpad, Lpad), lambda n: (n, 0, 0)),
            pl.BlockSpec((Cout, K), lambda n: (0, 0)),
            pl.BlockSpec((Cout, 1), lambda n: (0, 0)),
        ],
        out_specs=pl.BlockSpec((1, Cout, HW), lambda n: (n, 0, 0)),
        scratch_shapes=[pltpu.VMEM((K, HW), jnp.bfloat16)],
        # "parallel" over N shards batch elements across TensorCores on v7x.
        compiler_params=pltpu.CompilerParams(
            dimension_semantics=("parallel",)),
        # NOTE: at production image sizes, add an H-tiling grid axis with a
        # (KH-1)-row halo; at 16x16 everything (<0.3 MiB VMEM) fits trivially.
    )(xcols, w_mat, b2)

    # Output is already channel-major and lane-dense; free reshape to NCHW.
    return out_flat.reshape(N, Cout, H, W)


def _reference(x_nchw, weight_oihw, bias):
    x_pad = jnp.pad(x_nchw, ((0, 0), (0, 0), (PAD, PAD), (PAD, PAD)),
                    mode="reflect")
    y = jax.lax.conv_general_dilated(
        x_pad.astype(jnp.float32), weight_oihw.astype(jnp.float32),
        window_strides=(1, 1), padding="VALID",
        dimension_numbers=("NCHW", "OIHW", "NCHW"))
    return jnp.tanh(y + bias[None, :, None, None])


if __name__ == "__main__":
    key = jax.random.PRNGKey(0)
    k_x, k_w, k_b = jax.random.split(key, 3)

    N, Cin, H, W = 2, 4, 16, 16
    Cout = 8

    x = jax.random.normal(k_x, (N, Cin, H, W), dtype=jnp.float32)

    fan_in = Cin * KH * KW
    bound = 1.0 / jnp.sqrt(jnp.float32(fan_in))
    weight = jax.random.uniform(k_w, (Cout, Cin, KH, KW),
                                minval=-bound, maxval=bound, dtype=jnp.float32)
    bias = jax.random.uniform(k_b, (Cout,), minval=-bound, maxval=bound,
                              dtype=jnp.float32)

    out = jax.block_until_ready(final_padding_block_forward(x, weight, bias))
    ref = jax.block_until_ready(_reference(x, weight, bias))

    assert out.shape == (N, Cout, H, W), out.shape
    # bf16 MXU operands on the K=196 contraction -> relaxed tolerance vs f32 ref.
    err = float(jnp.max(jnp.abs(out - ref)))
    assert jnp.allclose(out, ref, atol=1e-2, rtol=1e-2), f"max abs err {err}"

    print("KERNEL_OK")
</pallas_src>

<mosaic_0001>
module attributes {stable_mosaic.version = 11 : i64} {
  func.func @kernel(%arg0: i32, %arg1: memref<1x32x384xbf16, #tpu.memory_space<vmem>>, %arg2: memref<8x224xbf16, #tpu.memory_space<vmem>>, %arg3: memref<8x1xf32, #tpu.memory_space<vmem>>, %arg4: memref<1x8x256xf32, #tpu.memory_space<vmem>>, %arg5: memref<224x256xbf16, #tpu.memory_space<vmem>>) attributes {dimension_semantics = [#tpu.dimension_semantics<parallel>], iteration_bounds = array<i64: 2>, scalar_prefetch = 0 : i64, scratch_operands = 1 : i64, tpu.core_type = #tpu.core_type<tc>, window_params = [{transform_indices = @transform_0, window_bounds = array<i64: 1, 32, 384>}, {pipeline_mode = #tpu.pipeline_mode<synchronous>, transform_indices = @transform_1, window_bounds = array<i64: 8, 224>}, {pipeline_mode = #tpu.pipeline_mode<synchronous>, transform_indices = @transform_2, window_bounds = array<i64: 8, 1>}, {transform_indices = @transform_3, window_bounds = array<i64: 1, 8, 256>}]} {
    %c0 = arith.constant 0 : index
    %c0_0 = arith.constant 0 : index
    %c0_1 = arith.constant 0 : index
    %0 = vector.load %arg1[%c0, %c0_0, %c0_1] : memref<1x32x384xbf16, #tpu.memory_space<vmem>>, vector<1x32x256xbf16>
    %1 = vector.shape_cast %0 : vector<1x32x256xbf16> to vector<32x256xbf16>
    %c0_2 = arith.constant 0 : index
    %c0_3 = arith.constant 0 : index
    %2 = vector.load %arg5[%c0_2, %c0_3] : memref<224x256xbf16, #tpu.memory_space<vmem>>, vector<32x256xbf16>
    tpu.vector_store %arg5[%c0_2, %c0_3], %1 {strides = array<i32>} : memref<224x256xbf16, #tpu.memory_space<vmem>>, vector<32x256xbf16>,
    %c0_4 = arith.constant 0 : index
    %c0_5 = arith.constant 0 : index
    %c16 = arith.constant 16 : index
    %3 = vector.load %arg1[%c0_4, %c0_5, %c16] : memref<1x32x384xbf16, #tpu.memory_space<vmem>>, vector<1x32x256xbf16>
    %4 = vector.shape_cast %3 : vector<1x32x256xbf16> to vector<32x256xbf16>
    %c32 = arith.constant 32 : index
    %c0_6 = arith.constant 0 : index
    %5 = vector.load %arg5[%c32, %c0_6] : memref<224x256xbf16, #tpu.memory_space<vmem>>, vector<32x256xbf16>
    tpu.vector_store %arg5[%c32, %c0_6], %4 {strides = array<i32>} : memref<224x256xbf16, #tpu.memory_space<vmem>>, vector<32x256xbf16>,
    %c0_7 = arith.constant 0 : index
    %c0_8 = arith.constant 0 : index
    %c32_9 = arith.constant 32 : index
    %6 = vector.load %arg1[%c0_7, %c0_8, %c32_9] : memref<1x32x384xbf16, #tpu.memory_space<vmem>>, vector<1x32x256xbf16>
    %7 = vector.shape_cast %6 : vector<1x32x256xbf16> to vector<32x256xbf16>
    %c64 = arith.constant 64 : index
    %c0_10 = arith.constant 0 : index
    %8 = vector.load %arg5[%c64, %c0_10] : memref<224x256xbf16, #tpu.memory_space<vmem>>, vector<32x256xbf16>
    tpu.vector_store %arg5[%c64, %c0_10], %7 {strides = array<i32>} : memref<224x256xbf16, #tpu.memory_space<vmem>>, vector<32x256xbf16>,
    %c0_11 = arith.constant 0 : index
    %c0_12 = arith.constant 0 : index
    %c48 = arith.constant 48 : index
    %9 = vector.load %arg1[%c0_11, %c0_12, %c48] : memref<1x32x384xbf16, #tpu.memory_space<vmem>>, vector<1x32x256xbf16>
    %10 = vector.shape_cast %9 : vector<1x32x256xbf16> to vector<32x256xbf16>
    %c96 = arith.constant 96 : index
    %c0_13 = arith.constant 0 : index
    %11 = vector.load %arg5[%c96, %c0_13] : memref<224x256xbf16, #tpu.memory_space<vmem>>, vector<32x256xbf16>
    tpu.vector_store %arg5[%c96, %c0_13], %10 {strides = array<i32>} : memref<224x256xbf16, #tpu.memory_space<vmem>>, vector<32x256xbf16>,
    %c0_14 = arith.constant 0 : index
    %c0_15 = arith.constant 0 : index
    %c64_16 = arith.constant 64 : index
    %12 = vector.load %arg1[%c0_14, %c0_15, %c64_16] : memref<1x32x384xbf16, #tpu.memory_space<vmem>>, vector<1x32x256xbf16>
    %13 = vector.shape_cast %12 : vector<1x32x256xbf16> to vector<32x256xbf16>
    %c128 = arith.constant 128 : index
    %c0_17 = arith.constant 0 : index
    %14 = vector.load %arg5[%c128, %c0_17] : memref<224x256xbf16, #tpu.memory_space<vmem>>, vector<32x256xbf16>
    tpu.vector_store %arg5[%c128, %c0_17], %13 {strides = array<i32>} : memref<224x256xbf16, #tpu.memory_space<vmem>>, vector<32x256xbf16>,
    %c0_18 = arith.constant 0 : index
    %c0_19 = arith.constant 0 : index
    %c80 = arith.constant 80 : index
    %15 = vector.load %arg1[%c0_18, %c0_19, %c80] : memref<1x32x384xbf16, #tpu.memory_space<vmem>>, vector<1x32x256xbf16>
    %16 = vector.shape_cast %15 : vector<1x32x256xbf16> to vector<32x256xbf16>
    %c160 = arith.constant 160 : index
    %c0_20 = arith.constant 0 : index
    %17 = vector.load %arg5[%c160, %c0_20] : memref<224x256xbf16, #tpu.memory_space<vmem>>, vector<32x256xbf16>
    tpu.vector_store %arg5[%c160, %c0_20], %16 {strides = array<i32>} : memref<224x256xbf16, #tpu.memory_space<vmem>>, vector<32x256xbf16>,
    %c0_21 = arith.constant 0 : index
    %c0_22 = arith.constant 0 : index
    %c96_23 = arith.constant 96 : index
    %18 = vector.load %arg1[%c0_21, %c0_22, %c96_23] : memref<1x32x384xbf16, #tpu.memory_space<vmem>>, vector<1x32x256xbf16>
    %19 = vector.shape_cast %18 : vector<1x32x256xbf16> to vector<32x256xbf16>
    %c192 = arith.constant 192 : index
    %c0_24 = arith.constant 0 : index
    %20 = vector.load %arg5[%c192, %c0_24] : memref<224x256xbf16, #tpu.memory_space<vmem>>, vector<32x256xbf16>
    tpu.vector_store %arg5[%c192, %c0_24], %19 {strides = array<i32>} : memref<224x256xbf16, #tpu.memory_space<vmem>>, vector<32x256xbf16>,
    %c0_25 = arith.constant 0 : index
    %c0_26 = arith.constant 0 : index
    %21 = vector.load %arg2[%c0_25, %c0_26] : memref<8x224xbf16, #tpu.memory_space<vmem>>, vector<8x224xbf16>
    %c0_27 = arith.constant 0 : index
    %c0_28 = arith.constant 0 : index
    %22 = vector.load %arg5[%c0_27, %c0_28] : memref<224x256xbf16, #tpu.memory_space<vmem>>, vector<224x256xbf16>
    %cst = arith.constant dense<0.000000e+00> : vector<8x256xf32>
    %23 = tpu.matmul %21, %22, %cst {dimension_numbers = #tpu.dot_dimension_numbers<[1], [0], [0], [1], [0, 0, 1, 1], [], []>} : vector<8x224xbf16>, vector<224x256xbf16>, vector<8x256xf32> -> vector<8x256xf32>
    %c0_29 = arith.constant 0 : index
    %c0_30 = arith.constant 0 : index
    %24 = vector.load %arg3[%c0_29, %c0_30] : memref<8x1xf32, #tpu.memory_space<vmem>>, vector<8x1xf32>
    %25 = vector.broadcast %24 : vector<8x1xf32> to vector<8x256xf32>
    %26 = arith.addf %23, %25 : vector<8x256xf32>
    %27 = math.tanh %26 : vector<8x256xf32>
    %c0_31 = arith.constant 0 : index
    %c0_32 = arith.constant 0 : index
    %c0_33 = arith.constant 0 : index
    %28 = vector.load %arg4[%c0_31, %c0_32, %c0_33] : memref<1x8x256xf32, #tpu.memory_space<vmem>>, vector<1x8x256xf32>
    %29 = vector.shape_cast %28 : vector<1x8x256xf32> to vector<8x256xf32>
    %30 = vector.shape_cast %27 : vector<8x256xf32> to vector<1x8x256xf32>
    tpu.vector_store %arg4[%c0_31, %c0_32, %c0_33], %30 {strides = array<i32>} : memref<1x8x256xf32, #tpu.memory_space<vmem>>, vector<1x8x256xf32>,
    return
  }
  func.func @transform_0(%arg0: i32) -> (i32, i32, i32) {
    %c0_i32 = arith.constant 0 : i32
    %c0_i32_0 = arith.constant 0 : i32
    %c0_i32_1 = arith.constant 0 : i32
    return %arg0, %c0_i32, %c0_i32_0 : i32, i32, i32
  }
  func.func @transform_1(%arg0: i32) -> (i32, i32) {
    %c0_i32 = arith.constant 0 : i32
    %c0_i32_0 = arith.constant 0 : i32
    %c0_i32_1 = arith.constant 0 : i32
    return %c0_i32, %c0_i32_0 : i32, i32
  }
  func.func @transform_2(%arg0: i32) -> (i32, i32) {
    %c0_i32 = arith.constant 0 : i32
    %c0_i32_0 = arith.constant 0 : i32
    %c0_i32_1 = arith.constant 0 : i32
    return %c0_i32, %c0_i32_0 : i32, i32
  }
  func.func @transform_3(%arg0: i32) -> (i32, i32, i32) {
    %c0_i32 = arith.constant 0 : i32
    %c0_i32_0 = arith.constant 0 : i32
    %c0_i32_1 = arith.constant 0 : i32
    return %arg0, %c0_i32, %c0_i32_0 : i32, i32, i32
  }
}

</mosaic_0001>

<llo_original>
// kernel: tpu_custom_call.1
$region0: #{tpu_custom_call.1}
  #allocation0 [shape = 'u32[]', space=smem, size = 0x4, offset = 0x4, fixed_abs, tag = 'smem constant byte address 0x4 - core index']
  #allocation1 [shape = 'u32[144,128]{1,0:T(1,128)}', space=vmem, size = 0x12000, scoped, tag = 'internal scratch']
  #allocation2 [shape = 'bf16[224,256]{1,0:T(16,128)(2,1)}', space=vmem, size = 0x1c000, scoped, tag = 'scratch operand']
  %s0 = inlined_call_operand.hbm [shape: bf16[2,32,384], index: 0, kind: input, shape index: {}]
  %s1 = inlined_call_operand.vmem [shape: bf16[8,224], index: 1, kind: input, shape index: {}]
  %s2 = inlined_call_operand.vmem [shape: f32[8,1], index: 2, kind: input, shape index: {}]
  %s3 = inlined_call_operand.hbm [shape: f32[2,8,256], index: 3, kind: output, shape index: {}]
  %s4 = sld [smem:[#allocation0]]
  $region49: #{tpu_custom_call.1} parent=0
    _
  %s6 = ssub.s32 1, %s4
  %s7 = scalar_select 0, %s6, %s4
  $region1: #{tpu_custom_call.1} parent=0
    #allocation3 [shape = 'u8[49152]{0}', space=vmem, size = 0xc000, scoped, tag = 'input window, operand 0']
    #allocation4 [shape = 's32[2]{0}', space=sflag, size = 0x8, scoped, tag = 'scoped memory for tpu_custom_call.1']
    #allocation5 [shape = 's32[2]{0}', space=sflag, size = 0x8, scoped, tag = 'scoped memory for tpu_custom_call.1']
    #allocation6 [shape = 'u8[16384]{0}', space=vmem, size = 0x4000, scoped, tag = 'output window, operand 0']
    %8 = vsyncpa [#allocation4], 0
    %s9 = scalar_lea.sflag [#allocation4], 1
    %10 = vsyncpa %s9, 0
    %11 = vsyncpa [#allocation5], 0
    %s12 = scalar_lea.sflag [#allocation5], 1
    %13 = vsyncpa %s12, 0
    loop: start=0, step=1, limit=4
    $region2: #{tpu_custom_call.1} parent=1 // loop_pre_header
      _
    $region3: #{tpu_custom_call.1} parent=1 // loop_header
      %s15 = sphi 0, %s19
      %p16 = scmp.ge.s32.totalorder %s15, 4
      %s25 = sphi 0, %s27
      %s28 = sphi 0, %s25
      %s29 = sphi 0, %s28
      %s45 = sphi 0, %s29
      %s49 = sphi 0, %s49
      %s51 = sphi 0, %s49
      %s52 = sphi 0, %s51
      %s66 = sphi 0, %s52
      %s70 = sphi 0, %s70
      %s72 = sphi 0, %s70
      %s73 = sphi 0, %s72
      %s87 = sphi 0, %s73
      %s93 = sphi 0, %s95
      %s96 = sphi 0, %s93
      %s97 = sphi 0, %s96
      %s113 = sphi 0, %s97
    $region4: #{tpu_custom_call.1} parent=1 // loop_header_branch
      %18 = sbr.rel (%p16) target = $region8
    $region5: #{tpu_custom_call.1} parent=1 // loop_body
      %s20 = ssub.s32 %s15, 1
      %s21 = ssub.s32 %s15, 2
      %s22 = sadd.s32 %s15, 1
      %s23 = ssub.s32 %s15, %s22
      %p24 = scmp.eq.s32.totalorder %s23, 0
      %s26 = sadd.s32 %s25, 1
      %s27 = scalar_select %p24, %s25, %s26
      %p30 = pneg %p24
      %p31 = scmp.eq.s32.totalorder %s15, 1
      %p32 = por %p30, %p31
      %p33 = scmp.ne.s32.totalorder %s25, %s28
      %p34 = scmp.eq.s32.totalorder %s15, 0
      %p35 = por %p33, %p34
      %p36 = scmp.ne.s32.totalorder %s25, %s28
      %p37 = scmp.eq.s32.totalorder %s20, 1
      %p38 = por %p36, %p37
      %p39 = scmp.ne.s32.totalorder %s28, %s29
      %p40 = scmp.eq.s32.totalorder %s20, 0
      %p41 = por %p39, %p40
      %p42 = scmp.ne.s32.totalorder %s28, %s29
      %p43 = scmp.eq.s32.totalorder %s21, 1
      %p44 = por %p42, %p43
      %p46 = scmp.ne.s32.totalorder %s29, %s45
      %p47 = scmp.eq.s32.totalorder %s21, 0
      %p48 = por %p46, %p47
      %s50 = sadd.s32 %s49, 1
      %p53 = scmp.eq.s32.totalorder %s15, 1
      %p54 = scmp.ne.s32.totalorder %s49, %s51
      %p55 = scmp.eq.s32.totalorder %s15, 0
      %p56 = por %p54, %p55
      %p57 = scmp.ne.s32.totalorder %s49, %s51
      %p58 = scmp.eq.s32.totalorder %s20, 1
      %p59 = por %p57, %p58
      %p60 = scmp.ne.s32.totalorder %s51, %s52
      %p61 = scmp.eq.s32.totalorder %s20, 0
      %p62 = por %p60, %p61
      %p63 = scmp.ne.s32.totalorder %s51, %s52
      %p64 = scmp.eq.s32.totalorder %s21, 1
      %p65 = por %p63, %p64
      %p67 = scmp.ne.s32.totalorder %s52, %s66
      %p68 = scmp.eq.s32.totalorder %s21, 0
      %p69 = por %p67, %p68
      %s71 = sadd.s32 %s70, 1
      %p74 = scmp.eq.s32.totalorder %s15, 1
      %p75 = scmp.ne.s32.totalorder %s70, %s72
      %p76 = scmp.eq.s32.totalorder %s15, 0
      %p77 = por %p75, %p76
      %p78 = scmp.ne.s32.totalorder %s70, %s72
      %p79 = scmp.eq.s32.totalorder %s20, 1
      %p80 = por %p78, %p79
      %p81 = scmp.ne.s32.totalorder %s72, %s73
      %p82 = scmp.eq.s32.totalorder %s20, 0
      %p83 = por %p81, %p82
      %p84 = scmp.ne.s32.totalorder %s72, %s73
      %p85 = scmp.eq.s32.totalorder %s21, 1
      %p86 = por %p84, %p85
      %p88 = scmp.ne.s32.totalorder %s73, %s87
      %p89 = scmp.eq.s32.totalorder %s21, 0
      %p90 = por %p88, %p89
      %s91 = ssub.s32 %s15, %s22
      %p92 = scmp.eq.s32.totalorder %s91, 0
      %s94 = sadd.s32 %s93, 1
      %s95 = scalar_select %p92, %s93, %s94
      %p98 = pneg %p92
      %p99 = scmp.eq.s32.totalorder %s15, 1
      %p100 = por %p98, %p99
      %p101 = scmp.ne.s32.totalorder %s93, %s96
      %p102 = scmp.eq.s32.totalorder %s15, 0
      %p103 = por %p101, %p102
      %p104 = scmp.ne.s32.totalorder %s93, %s96
      %p105 = scmp.eq.s32.totalorder %s20, 1
      %p106 = por %p104, %p105
      %p107 = scmp.ne.s32.totalorder %s96, %s97
      %p108 = scmp.eq.s32.totalorder %s20, 0
      %p109 = por %p107, %p108
      %p110 = scmp.ne.s32.totalorder %s96, %s97
      %p111 = scmp.eq.s32.totalorder %s21, 1
      %p112 = por %p110, %p111
      %p114 = scmp.ne.s32.totalorder %s97, %s113
      %p115 = scmp.eq.s32.totalorder %s21, 0
      %p116 = por %p114, %p115
      %p117 = scmp.le.s32.totalorder 1, %s15
      %p118 = scmp.lt.s32.totalorder %s15, 3
      %p119 = pnand %p117, %p118
      %p120 = pneg %p119
      // Predicated region
      $region9: #{tpu_custom_call.1} parent=5 // pred_check
        _
      $region10: #{tpu_custom_call.1} parent=5 // pred_check_branch
        %122 = sbr.rel (%p119) target = $region12
      $region11: #{tpu_custom_call.1} parent=5 // pred_region
        %s123 = ssub.s32 %s15, 1
        // Predicated region
        $region13: #{tpu_custom_call.1} parent=11 // pred_check
          %p124 = pneg %p62
        $region14: #{tpu_custom_call.1} parent=11 // pred_check_branch
          %126 = sbr.rel (%p124) target = $region16
        $region15: #{tpu_custom_call.1} parent=11 // pred_region
          _
        $region16: #{tpu_custom_call.1} parent=11 // pred_fallthru
          _
        // Predicated region
        $region17: #{tpu_custom_call.1} parent=11 // pred_check
          %p127 = pneg %p83
        $region18: #{tpu_custom_call.1} parent=11 // pred_check_branch
          %129 = sbr.rel (%p127) target = $region20
        $region19: #{tpu_custom_call.1} parent=11 // pred_region
          _
        $region20: #{tpu_custom_call.1} parent=11 // pred_fallthru
          _
      $region12: #{tpu_custom_call.1} parent=5 // pred_fallthru
        _
      %p130 = scmp.lt.s32.totalorder %s15, 2
      // Predicated region
      $region21: #{tpu_custom_call.1} parent=5 // pred_check
        %p131 = pneg %p130
      $region22: #{tpu_custom_call.1} parent=5 // pred_check_branch
        %133 = sbr.rel (%p131) target = $region24
      $region23: #{tpu_custom_call.1} parent=5 // pred_region
        // Predicated region
        $region25: #{tpu_custom_call.1} parent=23 // pred_check
          %p134 = pneg %p35
        $region26: #{tpu_custom_call.1} parent=23 // pred_check_branch
          %136 = sbr.rel (%p134) target = $region28
        $region27: #{tpu_custom_call.1} parent=23 // pred_region
          %s137 = sand.u32 %s25, 1
          %s138 = scalar_lea.sflag [#allocation4], %s137
          %s139 = sand.u32 %s25, 1
          %s140 = smul.addr %s139, 48
          %s141 = scalar_lea.vmem [#allocation3], %s140
          %s143 = ssub.s32 768, 768
          %144 = vsyncadd %s138, %s143
          %s145 = smul.addr %s15, 12
          %s146 = smul.addr %s145, 64
          %s147 = scalar_lea.hbm %s0, %s146
          %s148 = sshll.u32 %s141, 4
          %s149 = int_to_ptr.vmem [resolvable:$true] %s148
          %154 = dma.hbm_to_vmem [thread:$0]  %s147, 768, %s149, %s138, 192, 192, 12
        $region28: #{tpu_custom_call.1} parent=23 // pred_fallthru
          _
      $region24: #{tpu_custom_call.1} parent=5 // pred_fallthru
        _
      %p155 = scmp.le.s32.totalorder 1, %s15
      %p156 = scmp.lt.s32.totalorder %s15, 3
      %p157 = pnand %p155, %p156
      %p158 = pneg %p157
      // Predicated region
      $region29: #{tpu_custom_call.1} parent=5 // pred_check
        _
      $region30: #{tpu_custom_call.1} parent=5 // pred_check_branch
        %160 = sbr.rel (%p157) target = $region32
      $region31: #{tpu_custom_call.1} parent=5 // pred_region
        %s161 = ssub.s32 %s15, 1
        %s162 = sand.u32 %s28, 1
        %s163 = scalar_lea.sflag [#allocation4], %s162
        %s164 = sand.u32 %s28, 1
        %s165 = smul.addr %s164, 48
        %s166 = scalar_lea.vmem [#allocation3], %s165
        // Predicated region
        $region33: #{tpu_custom_call.1} parent=31 // pred_check
          %p167 = pneg %p41
        $region34: #{tpu_custom_call.1} parent=31 // pred_check_branch
          %169 = sbr.rel (%p167) target = $region36
        $region35: #{tpu_custom_call.1} parent=31 // pred_region
          %170 = dma.done %s163, 768
        $region36: #{tpu_custom_call.1} parent=31 // pred_fallthru
          _
        %s171 = sand.u32 %s28, 1
        %s172 = scalar_lea.sflag [#allocation4], %s171
        %s173 = sand.u32 %s28, 1
        %s174 = smul.addr %s173, 48
        %s175 = scalar_lea.vmem [#allocation3], %s174
        %p176 = pneg %p41
        %p177 = pneg %p38
        %p178 = pneg %p62
        %p179 = pneg %p59
        %p180 = pneg %p83
        %p181 = pneg %p80
        %p182 = pneg %p109
        %p183 = pneg %p106
        %s184 = sand.u32 %s96, 1
        %s185 = scalar_lea.sflag [#allocation5], %s184
        %s186 = sand.u32 %s96, 1
        %s187 = smul.addr %s186, 16
        %s188 = scalar_lea.vmem [#allocation6], %s187
        %v190 = vld [vmem:[%s166] sm:$0xff]
        %v191 = vld [vmem:[%s166 + $0xc] sm:$0xff]
        %v192 = vld [vmem:[%s166 + $0x18] sm:$0xff]
        %v193 = vld [vmem:[%s166 + $0x24] sm:$0xff]
        %v198 = vunpack.c.l.b16 %v190
        %v199 = vunpack.c.h.b16 %v190
        %v200 = vunpack.c.l.b16 %v191
        %v201 = vunpack.c.h.b16 %v191
        %v202 = vunpack.c.l.b16 %v192
        %v203 = vunpack.c.h.b16 %v192
        %v204 = vunpack.c.l.b16 %v193
        %v205 = vunpack.c.h.b16 %v193
        %v206 = vpack.c.b16 %v200, %v198
        %v207 = vpack.c.b16 %v201, %v199
        %v208 = vpack.c.b16 %v204, %v202
        %v209 = vpack.c.b16 %v205, %v203
        %214 = vst [vmem:[#allocation2] sm:$0xff] %v206
        %215 = vst [vmem:[#allocation2 + $0x8] sm:$0xff] %v207
        %216 = vst [vmem:[#allocation2 + $0x10] sm:$0xff] %v208
        %217 = vst [vmem:[#allocation2 + $0x18] sm:$0xff] %v209
        %v218 = vld [vmem:[%s166] sm:$0xff]
        %v219 = vld [vmem:[%s166 + $0x8] sm:$0xf]
        %v220 = vld [vmem:[%s166 + $0xc] sm:$0xff]
        %v221 = vld [vmem:[%s166 + $0x14] sm:$0xf]
        %v222 = vld [vmem:[%s166 + $0x18] sm:$0xff]
        %v223 = vld [vmem:[%s166 + $0x20] sm:$0xf]
        %v224 = vld [vmem:[%s166 + $0x24] sm:$0xff]
        %v225 = vld [vmem:[%s166 + $0x2c] sm:$0xf]
        %v234 = vunpack.c.l.b16 %v218
        %v235 = vunpack.c.h.b16 %v218
        %v236 = vunpack.c.l.b16 %v219
        %v237 = vunpack.c.l.b16 %v220
        %v238 = vunpack.c.h.b16 %v220
        %v239 = vunpack.c.l.b16 %v221
        %v240 = vunpack.c.l.b16 %v222
        %v241 = vunpack.c.h.b16 %v222
        %v242 = vunpack.c.l.b16 %v223
        %v243 = vunpack.c.l.b16 %v224
        %v244 = vunpack.c.h.b16 %v224
        %v245 = vunpack.c.l.b16 %v225
        %v246 = vpack.c.b16 %v237, %v234
        %v247 = vpack.c.b16 %v238, %v235
        %v248 = vpack.c.b16 %v239, %v236
        %v249 = vpack.c.b16 %v243, %v240
        %v250 = vpack.c.b16 %v244, %v241
        %v251 = vpack.c.b16 %v245, %v242
        %252 = vrot.lane.b32.xlu0 %v246, 112
        %v253 = vpop.permute.xlu0 %252
        %254 = vrot.lane.b32.xlu0 %v247, 112
        %v255 = vpop.permute.xlu0 %254
        %256 = vrot.lane.b32.xlu0 %v248, 112
        %v257 = vpop.permute.xlu0 %256
        %258 = vrot.lane.b32.xlu0 %v249, 112
        %v259 = vpop.permute.xlu0 %258
        %260 = vrot.lane.b32.xlu0 %v250, 112
        %v261 = vpop.permute.xlu0 %260
        %262 = vrot.lane.b32.xlu0 %v251, 112
        %v263 = vpop.permute.xlu0 %262
        %vm264 = vcmask 916480
        %v265 = vsel %vm264, %v253, %v255
        %v266 = vsel %vm264, %v255, %v257
        %v267 = vsel %vm264, %v259, %v261
        %v268 = vsel %vm264, %v261, %v263
        %273 = vst [vmem:[#allocation2 + $0x20] sm:$0xff] %v265
        %274 = vst [vmem:[#allocation2 + $0x28] sm:$0xff] %v266
        %275 = vst [vmem:[#allocation2 + $0x30] sm:$0xff] %v267
        %276 = vst [vmem:[#allocation2 + $0x38] sm:$0xff] %v268
        %v277 = vld [vmem:[%s166] sm:$0xff]
        %v278 = vld [vmem:[%s166 + $0x8] sm:$0xf]
        %v279 = vld [vmem:[%s166 + $0xc] sm:$0xff]
        %v280 = vld [vmem:[%s166 + $0x14] sm:$0xf]
        %v281 = vld [vmem:[%s166 + $0x18] sm:$0xff]
        %v282 = vld [vmem:[%s166 + $0x20] sm:$0xf]
        %v283 = vld [vmem:[%s166 + $0x24] sm:$0xff]
        %v284 = vld [vmem:[%s166 + $0x2c] sm:$0xf]
        %v293 = vunpack.c.l.b16 %v277
        %v294 = vunpack.c.h.b16 %v277
        %v295 = vunpack.c.l.b16 %v278
        %v296 = vunpack.c.l.b16 %v279
        %v297 = vunpack.c.h.b16 %v279
        %v298 = vunpack.c.l.b16 %v280
        %v299 = vunpack.c.l.b16 %v281
        %v300 = vunpack.c.h.b16 %v281
        %v301 = vunpack.c.l.b16 %v282
        %v302 = vunpack.c.l.b16 %v283
        %v303 = vunpack.c.h.b16 %v283
        %v304 = vunpack.c.l.b16 %v284
        %v305 = vpack.c.b16 %v296, %v293
        %v306 = vpack.c.b16 %v297, %v294
        %v307 = vpack.c.b16 %v298, %v295
        %v308 = vpack.c.b16 %v302, %v299
        %v309 = vpack.c.b16 %v303, %v300
        %v310 = vpack.c.b16 %v304, %v301
        %311 = vrot.lane.b32.xlu0 %v305, 96
        %v312 = vpop.permute.xlu0 %311
        %313 = vrot.lane.b32.xlu0 %v306, 96
        %v314 = vpop.permute.xlu0 %313
        %315 = vrot.lane.b32.xlu0 %v307, 96
        %v316 = vpop.permute.xlu0 %315
        %317 = vrot.lane.b32.xlu0 %v308, 96
        %v318 = vpop.permute.xlu0 %317
        %319 = vrot.lane.b32.xlu0 %v309, 96
        %v320 = vpop.permute.xlu0 %319
        %321 = vrot.lane.b32.xlu0 %v310, 96
        %v322 = vpop.permute.xlu0 %321
        %vm323 = vcmask 785408
        %v324 = vsel %vm323, %v312, %v314
        %v325 = vsel %vm323, %v314, %v316
        %v326 = vsel %vm323, %v318, %v320
        %v327 = vsel %vm323, %v320, %v322
        %332 = vst [vmem:[#allocation2 + $0x40] sm:$0xff] %v324
        %333 = vst [vmem:[#allocation2 + $0x48] sm:$0xff] %v325
        %334 = vst [vmem:[#allocation2 + $0x50] sm:$0xff] %v326
        %335 = vst [vmem:[#allocation2 + $0x58] sm:$0xff] %v327
        %v336 = vld [vmem:[%s166] sm:$0xff]
        %v337 = vld [vmem:[%s166 + $0x8] sm:$0xf]
        %v338 = vld [vmem:[%s166 + $0xc] sm:$0xff]
        %v339 = vld [vmem:[%s166 + $0x14] sm:$0xf]
        %v340 = vld [vmem:[%s166 + $0x18] sm:$0xff]
        %v341 = vld [vmem:[%s166 + $0x20] sm:$0xf]
        %v342 = vld [vmem:[%s166 + $0x24] sm:$0xff]
        %v343 = vld [vmem:[%s166 + $0x2c] sm:$0xf]
        %v352 = vunpack.c.l.b16 %v336
        %v353 = vunpack.c.h.b16 %v336
        %v354 = vunpack.c.l.b16 %v337
        %v355 = vunpack.c.l.b16 %v338
        %v356 = vunpack.c.h.b16 %v338
        %v357 = vunpack.c.l.b16 %v339
        %v358 = vunpack.c.l.b16 %v340
        %v359 = vunpack.c.h.b16 %v340
        %v360 = vunpack.c.l.b16 %v341
        %v361 = vunpack.c.l.b16 %v342
        %v362 = vunpack.c.h.b16 %v342
        %v363 = vunpack.c.l.b16 %v343
        %v364 = vpack.c.b16 %v355, %v352
        %v365 = vpack.c.b16 %v356, %v353
        %v366 = vpack.c.b16 %v357, %v354
        %v367 = vpack.c.b16 %v361, %v358
        %v368 = vpack.c.b16 %v362, %v359
        %v369 = vpack.c.b16 %v363, %v360
        %370 = vrot.lane.b32.xlu0 %v364, 80
        %v371 = vpop.permute.xlu0 %370
        %372 = vrot.lane.b32.xlu0 %v365, 80
        %v373 = vpop.permute.xlu0 %372
        %374 = vrot.lane.b32.xlu0 %v366, 80
        %v375 = vpop.permute.xlu0 %374
        %376 = vrot.lane.b32.xlu0 %v367, 80
        %v377 = vpop.permute.xlu0 %376
        %378 = vrot.lane.b32.xlu0 %v368, 80
        %v379 = vpop.permute.xlu0 %378
        %380 = vrot.lane.b32.xlu0 %v369, 80
        %v381 = vpop.permute.xlu0 %380
        %vm382 = vcmask 654336
        %v383 = vsel %vm382, %v371, %v373
        %v384 = vsel %vm382, %v373, %v375
        %v385 = vsel %vm382, %v377, %v379
        %v386 = vsel %vm382, %v379, %v381
        %391 = vst [vmem:[#allocation2 + $0x60] sm:$0xff] %v383
        %392 = vst [vmem:[#allocation2 + $0x68] sm:$0xff] %v384
        %393 = vst [vmem:[#allocation2 + $0x70] sm:$0xff] %v385
        %394 = vst [vmem:[#allocation2 + $0x78] sm:$0xff] %v386
        %v395 = vld [vmem:[%s166] sm:$0xff]
        %v396 = vld [vmem:[%s166 + $0x8] sm:$0xf]
        %v397 = vld [vmem:[%s166 + $0xc] sm:$0xff]
        %v398 = vld [vmem:[%s166 + $0x14] sm:$0xf]
        %v399 = vld [vmem:[%s166 + $0x18] sm:$0xff]
        %v400 = vld [vmem:[%s166 + $0x20] sm:$0xf]
        %v401 = vld [vmem:[%s166 + $0x24] sm:$0xff]
        %v402 = vld [vmem:[%s166 + $0x2c] sm:$0xf]
        %v411 = vunpack.c.l.b16 %v395
        %v412 = vunpack.c.h.b16 %v395
        %v413 = vunpack.c.l.b16 %v396
        %v414 = vunpack.c.l.b16 %v397
        %v415 = vunpack.c.h.b16 %v397
        %v416 = vunpack.c.l.b16 %v398
        %v417 = vunpack.c.l.b16 %v399
        %v418 = vunpack.c.h.b16 %v399
        %v419 = vunpack.c.l.b16 %v400
        %v420 = vunpack.c.l.b16 %v401
        %v421 = vunpack.c.h.b16 %v401
        %v422 = vunpack.c.l.b16 %v402
        %v423 = vpack.c.b16 %v414, %v411
        %v424 = vpack.c.b16 %v415, %v412
        %v425 = vpack.c.b16 %v416, %v413
        %v426 = vpack.c.b16 %v420, %v417
        %v427 = vpack.c.b16 %v421, %v418
        %v428 = vpack.c.b16 %v422, %v419
        %429 = vrot.lane.b32.xlu0 %v423, 64
        %v430 = vpop.permute.xlu0 %429
        %431 = vrot.lane.b32.xlu0 %v424, 64
        %v432 = vpop.permute.xlu0 %431
        %433 = vrot.lane.b32.xlu0 %v425, 64
        %v434 = vpop.permute.xlu0 %433
        %435 = vrot.lane.b32.xlu0 %v426, 64
        %v436 = vpop.permute.xlu0 %435
        %437 = vrot.lane.b32.xlu0 %v427, 64
        %v438 = vpop.permute.xlu0 %437
        %439 = vrot.lane.b32.xlu0 %v428, 64
        %v440 = vpop.permute.xlu0 %439
        %vm441 = vcmask 523264
        %v442 = vsel %vm441, %v430, %v432
        %v443 = vsel %vm441, %v432, %v434
        %v444 = vsel %vm441, %v436, %v438
        %v445 = vsel %vm441, %v438, %v440
        %450 = vst [vmem:[#allocation2 + $0x80] sm:$0xff] %v442
        %451 = vst [vmem:[#allocation2 + $0x88] sm:$0xff] %v443
        %452 = vst [vmem:[#allocation2 + $0x90] sm:$0xff] %v444
        %453 = vst [vmem:[#allocation2 + $0x98] sm:$0xff] %v445
        %v454 = vld [vmem:[%s166] sm:$0xff]
        %v455 = vld [vmem:[%s166 + $0x8] sm:$0xf]
        %v456 = vld [vmem:[%s166 + $0xc] sm:$0xff]
        %v457 = vld [vmem:[%s166 + $0x14] sm:$0xf]
        %v458 = vld [vmem:[%s166 + $0x18] sm:$0xff]
        %v459 = vld [vmem:[%s166 + $0x20] sm:$0xf]
        %v460 = vld [vmem:[%s166 + $0x24] sm:$0xff]
        %v461 = vld [vmem:[%s166 + $0x2c] sm:$0xf]
        %v470 = vunpack.c.l.b16 %v454
        %v471 = vunpack.c.h.b16 %v454
        %v472 = vunpack.c.l.b16 %v455
        %v473 = vunpack.c.l.b16 %v456
        %v474 = vunpack.c.h.b16 %v456
        %v475 = vunpack.c.l.b16 %v457
        %v476 = vunpack.c.l.b16 %v458
        %v477 = vunpack.c.h.b16 %v458
        %v478 = vunpack.c.l.b16 %v459
        %v479 = vunpack.c.l.b16 %v460
        %v480 = vunpack.c.h.b16 %v460
        %v481 = vunpack.c.l.b16 %v461
        %v482 = vpack.c.b16 %v473, %v470
        %v483 = vpack.c.b16 %v474, %v471
        %v484 = vpack.c.b16 %v475, %v472
        %v485 = vpack.c.b16 %v479, %v476
        %v486 = vpack.c.b16 %v480, %v477
        %v487 = vpack.c.b16 %v481, %v478
        %488 = vrot.lane.b32.xlu0 %v482, 48
        %v489 = vpop.permute.xlu0 %488
        %490 = vrot.lane.b32.xlu0 %v483, 48
        %v491 = vpop.permute.xlu0 %490
        %492 = vrot.lane.b32.xlu0 %v484, 48
        %v493 = vpop.permute.xlu0 %492
        %494 = vrot.lane.b32.xlu0 %v485, 48
        %v495 = vpop.permute.xlu0 %494
        %496 = vrot.lane.b32.xlu0 %v486, 48
        %v497 = vpop.permute.xlu0 %496
        %498 = vrot.lane.b32.xlu0 %v487, 48
        %v499 = vpop.permute.xlu0 %498
        %vm500 = vcmask 392192
        %v501 = vsel %vm500, %v489, %v491
        %v502 = vsel %vm500, %v491, %v493
        %v503 = vsel %vm500, %v495, %v497
        %v504 = vsel %vm500, %v497, %v499
        %509 = vst [vmem:[#allocation2 + $0xa0] sm:$0xff] %v501
        %510 = vst [vmem:[#allocation2 + $0xa8] sm:$0xff] %v502
        %511 = vst [vmem:[#allocation2 + $0xb0] sm:$0xff] %v503
        %512 = vst [vmem:[#allocation2 + $0xb8] sm:$0xff] %v504
        %v513 = vld [vmem:[%s166] sm:$0xff]
        %v514 = vld [vmem:[%s166 + $0x8] sm:$0xf]
        %v515 = vld [vmem:[%s166 + $0xc] sm:$0xff]
        %v516 = vld [vmem:[%s166 + $0x14] sm:$0xf]
        %v517 = vld [vmem:[%s166 + $0x18] sm:$0xff]
        %v518 = vld [vmem:[%s166 + $0x20] sm:$0xf]
        %v519 = vld [vmem:[%s166 + $0x24] sm:$0xff]
        %v520 = vld [vmem:[%s166 + $0x2c] sm:$0xf]
        %v529 = vunpack.c.l.b16 %v513
        %v530 = vunpack.c.h.b16 %v513
        %v531 = vunpack.c.l.b16 %v514
        %v532 = vunpack.c.l.b16 %v515
        %v533 = vunpack.c.h.b16 %v515
        %v534 = vunpack.c.l.b16 %v516
        %v535 = vunpack.c.l.b16 %v517
        %v536 = vunpack.c.h.b16 %v517
        %v537 = vunpack.c.l.b16 %v518
        %v538 = vunpack.c.l.b16 %v519
        %v539 = vunpack.c.h.b16 %v519
        %v540 = vunpack.c.l.b16 %v520
        %v541 = vpack.c.b16 %v532, %v529
        %v542 = vpack.c.b16 %v533, %v530
        %v543 = vpack.c.b16 %v534, %v531
        %v544 = vpack.c.b16 %v538, %v535
        %v545 = vpack.c.b16 %v539, %v536
        %v546 = vpack.c.b16 %v540, %v537
        %547 = vrot.lane.b32.xlu0 %v541, 32
        %v548 = vpop.permute.xlu0 %547
        %549 = vrot.lane.b32.xlu0 %v542, 32
        %v550 = vpop.permute.xlu0 %549
        %551 = vrot.lane.b32.xlu0 %v543, 32
        %v552 = vpop.permute.xlu0 %551
        %553 = vrot.lane.b32.xlu0 %v544, 32
        %v554 = vpop.permute.xlu0 %553
        %555 = vrot.lane.b32.xlu0 %v545, 32
        %v556 = vpop.permute.xlu0 %555
        %557 = vrot.lane.b32.xlu0 %v546, 32
        %v558 = vpop.permute.xlu0 %557
        %vm559 = vcmask 261120
        %v560 = vsel %vm559, %v548, %v550
        %v561 = vsel %vm559, %v550, %v552
        %v562 = vsel %vm559, %v554, %v556
        %v563 = vsel %vm559, %v556, %v558
        %568 = vst [vmem:[#allocation2 + $0xc0] sm:$0xff] %v560
        %569 = vst [vmem:[#allocation2 + $0xc8] sm:$0xff] %v561
        %570 = vst [vmem:[#allocation2 + $0xd0] sm:$0xff] %v562
        %571 = vst [vmem:[#allocation2 + $0xd8] sm:$0xff] %v563
        %v572 = vld [vmem:[%s1] sm:$0xff]
        %v573 = vld [vmem:[#allocation2] sm:$0xff]
        %v574 = vld [vmem:[#allocation2 + $0x8] sm:$0xff]
        %v575 = vld [vmem:[#allocation2 + $0x10] sm:$0xff]
        %v576 = vld [vmem:[#allocation2 + $0x18] sm:$0xff]
        %v577 = vld [vmem:[#allocation2 + $0x20] sm:$0xff]
        %v578 = vld [vmem:[#allocation2 + $0x28] sm:$0xff]
        %v579 = vld [vmem:[#allocation2 + $0x30] sm:$0xff]
        %v580 = vld [vmem:[#allocation2 + $0x38] sm:$0xff]
        %v581 = vld [vmem:[#allocation2 + $0x40] sm:$0xff]
        %v582 = vld [vmem:[#allocation2 + $0x48] sm:$0xff]
        %v583 = vld [vmem:[#allocation2 + $0x50] sm:$0xff]
        %v584 = vld [vmem:[#allocation2 + $0x58] sm:$0xff]
        %v585 = vld [vmem:[#allocation2 + $0x60] sm:$0xff]
        %v586 = vld [vmem:[#allocation2 + $0x68] sm:$0xff]
        %v587 = vld [vmem:[#allocation2 + $0x70] sm:$0xff]
        %v588 = vld [vmem:[#allocation2 + $0x78] sm:$0xff]
        %v589 = vld [vmem:[#allocation2 + $0x80] sm:$0xff]
        %v590 = vld [vmem:[#allocation2 + $0x88] sm:$0xff]
        %v591 = vld [vmem:[#allocation2 + $0x90] sm:$0xff]
        %v592 = vld [vmem:[#allocation2 + $0x98] sm:$0xff]
        %v593 = vld [vmem:[#allocation2 + $0xa0] sm:$0xff]
        %v594 = vld [vmem:[#allocation2 + $0xa8] sm:$0xff]
        %v595 = vld [vmem:[#allocation2 + $0xb0] sm:$0xff]
        %v596 = vld [vmem:[#allocation2 + $0xb8] sm:$0xff]
        %v597 = vld [vmem:[#allocation2 + $0xc0] sm:$0xff]
        %v598 = vld [vmem:[#allocation2 + $0xc8] sm:$0xff]
        %v599 = vld [vmem:[#allocation2 + $0xd0] sm:$0xff]
        %v600 = vld [vmem:[#allocation2 + $0xd8] sm:$0xff]
        %v601 = vld [vmem:[%s2] sm:$0xff]
        %603 = vset.pattern.permute.xlu0 0
        %604 = vperm.xlu0 %603, %v601
        %v605 = vpop.permute.xlu0 %604
        %v608 = vunpack.c.l.b16 %v572
        %v609 = vunpack.c.h.b16 %v572
        %v610 = vpack.c.b16 %v608, %v608
        %v611 = vpack.c.b16 %v609, %v609
        %vm613 = vcmask 785408
        %v615 = vsel %vm613, %v611, 0
        %617 = vmatprep.subr.bf16.mxu0 %v574
        %618 = vmatpush1.bf16.msra.mxu0 %v573
        %619 = vmatprep.subr.bf16.mxu0 %v576
        %620 = vmatpush1.bf16.msra.mxu0 %v575
        %621 = vmatprep.subr.bf16.mxu0 %v578
        %622 = vmatpush1.bf16.msra.mxu0 %v577
        %623 = vmatprep.subr.bf16.mxu0 %v580
        %624 = vmatpush1.bf16.msra.mxu0 %v579
        %625 = vmatprep.subr.bf16.mxu0 %v582
        %626 = vmatpush1.bf16.msra.mxu0 %v581
        %627 = vmatprep.subr.bf16.mxu0 %v584
        %628 = vmatpush1.bf16.msra.mxu0 %v583
        %629 = vmatprep.subr.bf16.mxu0 %v586
        %630 = vmatpush1.bf16.msra.mxu0 %v585
        %631 = vmatprep.subr.bf16.mxu0 %v588
        %632 = vmatpush1.bf16.msra.mxu0 %v587
        %633 = vmatprep.subr.bf16.mxu0 %v590
        %634 = vmatpush1.bf16.msra.mxu0 %v589
        %635 = vmatprep.subr.bf16.mxu0 %v592
        %636 = vmatpush1.bf16.msra.mxu0 %v591
        %637 = vmatprep.subr.bf16.mxu0 %v594
        %638 = vmatpush1.bf16.msra.mxu0 %v593
        %639 = vmatprep.subr.bf16.mxu0 %v596
        %640 = vmatpush1.bf16.msra.mxu0 %v595
        %641 = vmatprep.subr.bf16.mxu0 %v598
        %642 = vmatpush1.bf16.msra.mxu0 %v597
        %643 = vmatprep.subr.bf16.mxu0 %v600
        %644 = vmatpush1.bf16.msra.mxu0 %v599
        %645 = vmatprep.subr.bf16.mxu0 0
        %646 = vmatpush1.bf16.msra.mxu0 0
        %647 = vmatprep.subr.bf16.mxu0 0
        %648 = vmatpush1.bf16.msra.mxu0 0
        %649 = vmatprep.mubr.bf16.mxu0 %v615
        %650 = vmatmul.mubr.bf16.gmra.mrb[0].mxu0 %v610
        %v651 = vpop.f32.mrb[0].mxu0
        %v652 = vadd.f32 %v605, %v651
        %v653 = vpop.f32.mrb[0].mxu0
        %v654 = vadd.f32 %v605, %v653
        %v655 = vpop.f32.mrb[0].mxu0
        %v656 = vpop.f32.mrb[0].mxu0
        %657 = vdwg.mxu0
        %v658 = vtanh.pop %v652
        %v659 = vtanh.pop %v654
        %660 = vst [vmem:[%s188] sm:$0xff] %v658
        %661 = vst [vmem:[%s188 + $0x8] sm:$0xff] %v659
        %s662 = sand.u32 %s96, 1
        %s663 = scalar_lea.sflag [#allocation5], %s662
        %s664 = sand.u32 %s96, 1
        %s665 = smul.addr %s664, 16
        %s666 = scalar_lea.vmem [#allocation6], %s665
        // Predicated region
        $region37: #{tpu_custom_call.1} parent=31 // pred_check
          %p667 = pneg %p106
        $region38: #{tpu_custom_call.1} parent=31 // pred_check_branch
          %669 = sbr.rel (%p667) target = $region40
        $region39: #{tpu_custom_call.1} parent=31 // pred_region
          %s671 = ssub.s32 256, 256
          %672 = vsyncadd %s663, %s671
          %s673 = smul.addr %s20, 2
          %s674 = smul.addr %s673, 128
          %s675 = scalar_lea.hbm %s3, %s674
          %s677 = sshll.u32 %s666, 4
          %s678 = int_to_ptr.vmem [resolvable:$true] %s677
          %680 = dma.vmem_to_hbm [thread:$0]  %s678, 256, %s675, %s663
        $region40: #{tpu_custom_call.1} parent=31 // pred_fallthru
          _
      $region32: #{tpu_custom_call.1} parent=5 // pred_fallthru
        _
      %p681 = scmp.le.s32.totalorder 2, %s15
      // Predicated region
      $region41: #{tpu_custom_call.1} parent=5 // pred_check
        %p682 = pneg %p681
      $region42: #{tpu_custom_call.1} parent=5 // pred_check_branch
        %684 = sbr.rel (%p682) target = $region44
      $region43: #{tpu_custom_call.1} parent=5 // pred_region
        %s685 = ssub.s32 %s15, 2
        // Predicated region
        $region45: #{tpu_custom_call.1} parent=43 // pred_check
          %p686 = pneg %p112
        $region46: #{tpu_custom_call.1} parent=43 // pred_check_branch
          %688 = sbr.rel (%p686) target = $region48
        $region47: #{tpu_custom_call.1} parent=43 // pred_region
          %s689 = sand.u32 %s97, 1
          %s690 = scalar_lea.sflag [#allocation5], %s689
          %s691 = sand.u32 %s97, 1
          %s692 = smul.addr %s691, 16
          %s693 = scalar_lea.vmem [#allocation6], %s692
          %694 = dma.done %s690, 256
        $region48: #{tpu_custom_call.1} parent=43 // pred_fallthru
          _
      $region44: #{tpu_custom_call.1} parent=5 // pred_fallthru
        _
    $region6: #{tpu_custom_call.1} parent=1 // loop_footer
      %s19 = sadd.s32 1, %s15
    $region7: #{tpu_custom_call.1} parent=1 // loop_footer_branch
      %14 = sbr.rel target = $region3
    $region8: #{tpu_custom_call.1} parent=1 // loop_exit
      _
    %695 = vsyncpa [#allocation4], 1
    %s696 = scalar_lea.sflag [#allocation4], 1
    %697 = vsyncpa %s696, 1
    %698 = vsyncpa [#allocation5], 1
    %s699 = scalar_lea.sflag [#allocation5], 1
    %700 = vsyncpa %s699, 1

</llo_original>
